<compile_context>
chip_gen: v5e
topology: v5e:2x2
jax: 0.10.0
libtpu: 0.0.40
codegen_flags: <defaults>
</compile_context>

<pallas_src>
import math

import jax
import jax.numpy as jnp
from jax.experimental import pallas as pl
from jax.experimental.pallas import tpu as pltpu


def transformer_kernel(
    x_ref,
    w_emb_ref, b_emb_ref,
    ln1_g_ref, ln1_b_ref,
    wqkv_ref, bqkv_ref,
    wo_ref, bo_ref,
    ln2_g_ref, ln2_b_ref,
    w1_ref, b1_ref, w2_ref, b2_ref,
    wfc_ref, bfc_ref,
    out_ref, enc_ref,
):
    eps = 1e-5
    TB, S, F = x_ref.shape
    D = wo_ref.shape[0]                                      # wo_t is [D, D]

    def layer_norm(h, g_ref, b_ref):
        mu = jnp.mean(h, axis=-1, keepdims=True)
        var = jnp.mean((h - mu) ** 2, axis=-1, keepdims=True)
        return (h - mu) * jax.lax.rsqrt(var + eps) * g_ref[...] + b_ref[...]

    # Flatten (TB, S) -> rows so every projection is a single [M,K]x[K,N] MXU dot.
    x = x_ref[...].astype(jnp.float32).reshape(TB * S, F)

    # ---- embedding: Linear(F -> D) ----
    emb = jnp.dot(x, w_emb_ref[...], preferred_element_type=jnp.float32) + b_emb_ref[...]

    # ---- encoder layer (norm_first=True, nhead=1) ----
    h = emb
    y1 = layer_norm(h, ln1_g_ref, ln1_b_ref)

    # Fused QKV projection (attention scale already folded into the Q slice).
    qkv = jnp.dot(y1, wqkv_ref[...], preferred_element_type=jnp.float32) + bqkv_ref[...]
    q = qkv[:, 0 * D:1 * D].reshape(TB, S, D)
    k = qkv[:, 1 * D:2 * D].reshape(TB, S, D)
    v = qkv[:, 2 * D:3 * D].reshape(TB, S, D)

    scores = jnp.einsum('bqd,bkd->bqk', q, k, preferred_element_type=jnp.float32)
    scores = scores - jnp.max(scores, axis=-1, keepdims=True)
    p = jnp.exp(scores)
    p = p * pl.reciprocal(jnp.sum(p, axis=-1, keepdims=True), approx=True)
    attn = jnp.einsum('bqk,bkd->bqd', p, v, preferred_element_type=jnp.float32)
    attn = attn.reshape(TB * S, D)
    attn = jnp.dot(attn, wo_ref[...], preferred_element_type=jnp.float32) + bo_ref[...]
    h = h + attn

    y2 = layer_norm(h, ln2_g_ref, ln2_b_ref)
    ff = jnp.dot(y2, w1_ref[...], preferred_element_type=jnp.float32) + b1_ref[...]
    ff = jnp.maximum(ff, 0.0)
    ff = jnp.dot(ff, w2_ref[...], preferred_element_type=jnp.float32) + b2_ref[...]
    h = h + ff

    h3 = h.reshape(TB, S, D)
    enc_ref[...] = h3.astype(enc_ref.dtype)

    # ---- head: fc on the last token of each sequence in this batch block ----
    last = h3[:, S - 1, :]                                   # [TB, D]
    logit = jnp.dot(last, wfc_ref[...], preferred_element_type=jnp.float32) + bfc_ref[...]
    out_ref[...] = (1.0 / (1.0 + jnp.exp(-logit))).reshape(TB, 1, 1).astype(out_ref.dtype)


def transformer_forward(x, params, *, batch_block=1):
    B, S, F = x.shape
    D = params['w_emb_t'].shape[1]
    TB = batch_block
    assert B % TB == 0, "batch must be divisible by batch_block"
    grid = (B // TB,)

    weights = (
        params['w_emb_t'], params['b_emb'],
        params['ln1_g'], params['ln1_b'],
        params['wqkv_t'], params['bqkv'],
        params['wo_t'], params['bo'],
        params['ln2_g'], params['ln2_b'],
        params['w1_t'], params['b1'],
        params['w2_t'], params['b2'],
        params['wfc_t'], params['bfc'],
    )

    def resident(a):
        # Full-array block, constant index map -> weight stays VMEM-resident across the grid.
        return pl.BlockSpec(a.shape, lambda b: (0,) * a.ndim)

    x_spec = pl.BlockSpec((TB, S, F), lambda b: (b, 0, 0))
    out_spec = pl.BlockSpec((TB, 1, 1), lambda b: (b, 0, 0))
    enc_spec = pl.BlockSpec((TB, S, D), lambda b: (b, 0, 0))

    out3, enc = pl.pallas_call(
        transformer_kernel,
        grid=grid,
        out_shape=(
            jax.ShapeDtypeStruct((B, 1, 1), jnp.float32),
            jax.ShapeDtypeStruct((B, S, D), jnp.float32),
        ),
        in_specs=[x_spec] + [resident(w) for w in weights],
        out_specs=(out_spec, enc_spec),
        compiler_params=pltpu.CompilerParams(
            # Batch-block axis is fully independent -> shard across TensorCores (v7x megacore).
            dimension_semantics=("parallel",),
        ),
    )(x, *weights)
    return out3.reshape(B, 1), enc


def init_params(key, input_features, d_model, dim_feedforward):
    """Deterministic PyTorch-style uniform(-1/sqrt(fan_in)) init, PyTorch [out, in] layout."""
    ks = jax.random.split(key, 16)

    def lin(kw, kb, out_f, in_f):
        bound = 1.0 / math.sqrt(in_f)
        w = jax.random.uniform(kw, (out_f, in_f), jnp.float32, -bound, bound)
        b = jax.random.uniform(kb, (out_f,), jnp.float32, -bound, bound)
        return w, b

    p = {}
    p['w_emb'], p['b_emb'] = lin(ks[0], ks[1], d_model, input_features)
    p['wq'], p['bq'] = lin(ks[2], ks[3], d_model, d_model)
    p['wk'], p['bk'] = lin(ks[4], ks[5], d_model, d_model)
    p['wv'], p['bv'] = lin(ks[6], ks[7], d_model, d_model)
    p['wo'], p['bo'] = lin(ks[8], ks[9], d_model, d_model)
    p['w1'], p['b1'] = lin(ks[10], ks[11], dim_feedforward, d_model)
    p['w2'], p['b2'] = lin(ks[12], ks[13], d_model, dim_feedforward)
    p['wfc'], p['bfc'] = lin(ks[14], ks[15], 1, d_model)
    p['ln1_g'] = jnp.ones((d_model,), jnp.float32)
    p['ln1_b'] = jnp.zeros((d_model,), jnp.float32)
    p['ln2_g'] = jnp.ones((d_model,), jnp.float32)
    p['ln2_b'] = jnp.zeros((d_model,), jnp.float32)
    return p


def prepare_params(p):
    """One-time transform of PyTorch-layout params into kernel-ready layout:
       - every weight transposed to [in, out]  (kernel does x @ W, no runtime transpose)
       - q/k/v fused into one [D, 3D] weight; 1/sqrt(D) attention scale folded into q weight+bias
       - biases as [1, out] rows for lane broadcast
    """
    D = p['wq'].shape[0]
    scale = 1.0 / math.sqrt(float(D))        # head_dim == d_model (nhead=1)
    kp = {}
    kp['w_emb_t'] = p['w_emb'].T
    kp['b_emb'] = p['b_emb'].reshape(1, -1)
    kp['wqkv_t'] = jnp.concatenate([(p['wq'] * scale).T, p['wk'].T, p['wv'].T], axis=1)
    kp['bqkv'] = jnp.concatenate([p['bq'] * scale, p['bk'], p['bv']]).reshape(1, -1)
    kp['wo_t'] = p['wo'].T
    kp['bo'] = p['bo'].reshape(1, -1)
    kp['w1_t'] = p['w1'].T
    kp['b1'] = p['b1'].reshape(1, -1)
    kp['w2_t'] = p['w2'].T
    kp['b2'] = p['b2'].reshape(1, -1)
    kp['wfc_t'] = p['wfc'].T                 # [D, 1]
    kp['bfc'] = p['bfc'].reshape(1, -1)      # [1, 1]
    kp['ln1_g'] = p['ln1_g'].reshape(1, -1)
    kp['ln1_b'] = p['ln1_b'].reshape(1, -1)
    kp['ln2_g'] = p['ln2_g'].reshape(1, -1)
    kp['ln2_b'] = p['ln2_b'].reshape(1, -1)
    return kp


if __name__ == "__main__":
    # Small shapes consistent with the module's forward:
    # batch=2, seq(window_length)=8, input_features=4, d_model=32, dim_feedforward=64
    B, S, F = 2, 8, 4
    D, FF = 32, 64

    key = jax.random.PRNGKey(0)
    k_x, k_p = jax.random.split(key)
    x = jax.random.normal(k_x, (B, S, F), dtype=jnp.float32)
    params = prepare_params(init_params(k_p, F, D, FF))

    out, enc = transformer_forward(x, params, batch_block=1)
    out = jax.block_until_ready(out)
    enc = jax.block_until_ready(enc)

    assert out.shape == (B, 1) and enc.shape == (B, S, D)
    assert bool(jnp.all(jnp.isfinite(out))) and bool(jnp.all(jnp.isfinite(enc)))
    print("KERNEL_OK")
</pallas_src>

<mosaic_0001>
module attributes {stable_mosaic.version = 11 : i64} {
  func.func @transformer_kernel(%arg0: i32, %arg1: memref<1x8x4xf32, #tpu.memory_space<vmem>>, %arg2: memref<4x32xf32, #tpu.memory_space<vmem>>, %arg3: memref<1x32xf32, #tpu.memory_space<vmem>>, %arg4: memref<1x32xf32, #tpu.memory_space<vmem>>, %arg5: memref<1x32xf32, #tpu.memory_space<vmem>>, %arg6: memref<32x96xf32, #tpu.memory_space<vmem>>, %arg7: memref<1x96xf32, #tpu.memory_space<vmem>>, %arg8: memref<32x32xf32, #tpu.memory_space<vmem>>, %arg9: memref<1x32xf32, #tpu.memory_space<vmem>>, %arg10: memref<1x32xf32, #tpu.memory_space<vmem>>, %arg11: memref<1x32xf32, #tpu.memory_space<vmem>>, %arg12: memref<32x64xf32, #tpu.memory_space<vmem>>, %arg13: memref<1x64xf32, #tpu.memory_space<vmem>>, %arg14: memref<64x32xf32, #tpu.memory_space<vmem>>, %arg15: memref<1x32xf32, #tpu.memory_space<vmem>>, %arg16: memref<32x1xf32, #tpu.memory_space<vmem>>, %arg17: memref<1x1xf32, #tpu.memory_space<vmem>>, %arg18: memref<1x1x1xf32, #tpu.memory_space<vmem>>, %arg19: memref<1x8x32xf32, #tpu.memory_space<vmem>>) attributes {dimension_semantics = [#tpu.dimension_semantics<parallel>], iteration_bounds = array<i64: 2>, scalar_prefetch = 0 : i64, scratch_operands = 0 : i64, tpu.core_type = #tpu.core_type<tc>, window_params = [{transform_indices = @transform_0, window_bounds = array<i64: 1, 8, 4>}, {pipeline_mode = #tpu.pipeline_mode<synchronous>, transform_indices = @transform_1, window_bounds = array<i64: 4, 32>}, {pipeline_mode = #tpu.pipeline_mode<synchronous>, transform_indices = @transform_2, window_bounds = array<i64: 1, 32>}, {pipeline_mode = #tpu.pipeline_mode<synchronous>, transform_indices = @transform_3, window_bounds = array<i64: 1, 32>}, {pipeline_mode = #tpu.pipeline_mode<synchronous>, transform_indices = @transform_4, window_bounds = array<i64: 1, 32>}, {pipeline_mode = #tpu.pipeline_mode<synchronous>, transform_indices = @transform_5, window_bounds = array<i64: 32, 96>}, {pipeline_mode = #tpu.pipeline_mode<synchronous>, transform_indices = @transform_6, window_bounds = array<i64: 1, 96>}, {pipeline_mode = #tpu.pipeline_mode<synchronous>, transform_indices = @transform_7, window_bounds = array<i64: 32, 32>}, {pipeline_mode = #tpu.pipeline_mode<synchronous>, transform_indices = @transform_8, window_bounds = array<i64: 1, 32>}, {pipeline_mode = #tpu.pipeline_mode<synchronous>, transform_indices = @transform_9, window_bounds = array<i64: 1, 32>}, {pipeline_mode = #tpu.pipeline_mode<synchronous>, transform_indices = @transform_10, window_bounds = array<i64: 1, 32>}, {pipeline_mode = #tpu.pipeline_mode<synchronous>, transform_indices = @transform_11, window_bounds = array<i64: 32, 64>}, {pipeline_mode = #tpu.pipeline_mode<synchronous>, transform_indices = @transform_12, window_bounds = array<i64: 1, 64>}, {pipeline_mode = #tpu.pipeline_mode<synchronous>, transform_indices = @transform_13, window_bounds = array<i64: 64, 32>}, {pipeline_mode = #tpu.pipeline_mode<synchronous>, transform_indices = @transform_14, window_bounds = array<i64: 1, 32>}, {pipeline_mode = #tpu.pipeline_mode<synchronous>, transform_indices = @transform_15, window_bounds = array<i64: 32, 1>}, {pipeline_mode = #tpu.pipeline_mode<synchronous>, transform_indices = @transform_16, window_bounds = array<i64: 1, 1>}, {transform_indices = @transform_17, window_bounds = array<i64: 1, 1, 1>}, {transform_indices = @transform_18, window_bounds = array<i64: 1, 8, 32>}]} {
    %c0 = arith.constant 0 : index
    %c0_0 = arith.constant 0 : index
    %c0_1 = arith.constant 0 : index
    %0 = vector.load %arg1[%c0, %c0_0, %c0_1] : memref<1x8x4xf32, #tpu.memory_space<vmem>>, vector<1x8x4xf32>
    %1 = vector.shape_cast %0 : vector<1x8x4xf32> to vector<8x4xf32>
    %c0_2 = arith.constant 0 : index
    %c0_3 = arith.constant 0 : index
    %2 = vector.load %arg2[%c0_2, %c0_3] : memref<4x32xf32, #tpu.memory_space<vmem>>, vector<4x32xf32>
    %cst = arith.constant dense<0.000000e+00> : vector<8x32xf32>
    %3 = tpu.matmul %1, %2, %cst {dimension_numbers = #tpu.dot_dimension_numbers<[1], [0], [0], [1], [0, 0, 1, 1], [], []>} : vector<8x4xf32>, vector<4x32xf32>, vector<8x32xf32> -> vector<8x32xf32>
    %c0_4 = arith.constant 0 : index
    %c0_5 = arith.constant 0 : index
    %4 = vector.load %arg3[%c0_4, %c0_5] : memref<1x32xf32, #tpu.memory_space<vmem>>, vector<1x32xf32>
    %5 = vector.broadcast %4 : vector<1x32xf32> to vector<8x32xf32>
    %6 = arith.addf %3, %5 : vector<8x32xf32>
    %cst_6 = arith.constant dense<0.000000e+00> : vector<8xf32>
    %7 = vector.multi_reduction <add>, %6, %cst_6 [1] : vector<8x32xf32> to vector<8xf32>
    %8 = vector.shape_cast %7 : vector<8xf32> to vector<8x1xf32>
    %cst_7 = arith.constant 3.200000e+01 : f32
    %9 = vector.broadcast %cst_7 : f32 to vector<8x1xf32>
    %10 = arith.divf %8, %9 : vector<8x1xf32>
    %11 = vector.broadcast %10 : vector<8x1xf32> to vector<8x32xf32>
    %12 = arith.subf %6, %11 : vector<8x32xf32>
    %13 = arith.mulf %12, %12 : vector<8x32xf32>
    %cst_8 = arith.constant dense<0.000000e+00> : vector<8xf32>
    %14 = vector.multi_reduction <add>, %13, %cst_8 [1] : vector<8x32xf32> to vector<8xf32>
    %15 = vector.shape_cast %14 : vector<8xf32> to vector<8x1xf32>
    %cst_9 = arith.constant 3.200000e+01 : f32
    %16 = vector.broadcast %cst_9 : f32 to vector<8x1xf32>
    %17 = arith.divf %15, %16 : vector<8x1xf32>
    %18 = vector.broadcast %10 : vector<8x1xf32> to vector<8x32xf32>
    %19 = arith.subf %6, %18 : vector<8x32xf32>
    %cst_10 = arith.constant 9.99999974E-6 : f32
    %20 = vector.broadcast %cst_10 : f32 to vector<8x1xf32>
    %21 = arith.addf %17, %20 : vector<8x1xf32>
    %22 = math.rsqrt %21 : vector<8x1xf32>
    %23 = vector.broadcast %22 : vector<8x1xf32> to vector<8x32xf32>
    %24 = arith.mulf %19, %23 : vector<8x32xf32>
    %c0_11 = arith.constant 0 : index
    %c0_12 = arith.constant 0 : index
    %25 = vector.load %arg4[%c0_11, %c0_12] : memref<1x32xf32, #tpu.memory_space<vmem>>, vector<1x32xf32>
    %26 = vector.broadcast %25 : vector<1x32xf32> to vector<8x32xf32>
    %27 = arith.mulf %24, %26 : vector<8x32xf32>
    %c0_13 = arith.constant 0 : index
    %c0_14 = arith.constant 0 : index
    %28 = vector.load %arg5[%c0_13, %c0_14] : memref<1x32xf32, #tpu.memory_space<vmem>>, vector<1x32xf32>
    %29 = vector.broadcast %28 : vector<1x32xf32> to vector<8x32xf32>
    %30 = arith.addf %27, %29 : vector<8x32xf32>
    %c0_15 = arith.constant 0 : index
    %c0_16 = arith.constant 0 : index
    %31 = vector.load %arg6[%c0_15, %c0_16] : memref<32x96xf32, #tpu.memory_space<vmem>>, vector<32x96xf32>
    %cst_17 = arith.constant dense<0.000000e+00> : vector<8x96xf32>
    %32 = tpu.matmul %30, %31, %cst_17 {dimension_numbers = #tpu.dot_dimension_numbers<[1], [0], [0], [1], [0, 0, 1, 1], [], []>} : vector<8x32xf32>, vector<32x96xf32>, vector<8x96xf32> -> vector<8x96xf32>
    %c0_18 = arith.constant 0 : index
    %c0_19 = arith.constant 0 : index
    %33 = vector.load %arg7[%c0_18, %c0_19] : memref<1x96xf32, #tpu.memory_space<vmem>>, vector<1x96xf32>
    %34 = vector.broadcast %33 : vector<1x96xf32> to vector<8x96xf32>
    %35 = arith.addf %32, %34 : vector<8x96xf32>
    %36 = vector.extract_strided_slice %35 {offsets = [0, 0], sizes = [8, 32], strides = [1, 1]} : vector<8x96xf32> to vector<8x32xf32>
    %37 = vector.shape_cast %36 : vector<8x32xf32> to vector<1x8x32xf32>
    %38 = vector.extract_strided_slice %35 {offsets = [0, 32], sizes = [8, 32], strides = [1, 1]} : vector<8x96xf32> to vector<8x32xf32>
    %39 = vector.shape_cast %38 : vector<8x32xf32> to vector<1x8x32xf32>
    %40 = vector.extract_strided_slice %35 {offsets = [0, 64], sizes = [8, 32], strides = [1, 1]} : vector<8x96xf32> to vector<8x32xf32>
    %41 = vector.shape_cast %40 : vector<8x32xf32> to vector<1x8x32xf32>
    "tpu.trace_start"() <{level = 10 : i32, message = "bqd,bkd->bqk"}> : () -> ()
    %cst_20 = arith.constant dense<0.000000e+00> : vector<1x8x8xf32>
    %42 = tpu.matmul %37, %39, %cst_20 {dimension_numbers = #tpu.dot_dimension_numbers<[2], [2], [1], [1], [0, 0, 0, 1, 1, 1], [0], [0]>} : vector<1x8x32xf32>, vector<1x8x32xf32>, vector<1x8x8xf32> -> vector<1x8x8xf32>
    "tpu.trace_stop"() : () -> ()
    %cst_21 = arith.constant dense<0xFF800000> : vector<1x8xf32>
    %43 = vector.multi_reduction <maximumf>, %42, %cst_21 [2] : vector<1x8x8xf32> to vector<1x8xf32>
    %44 = vector.shape_cast %43 : vector<1x8xf32> to vector<1x8x1xf32>
    %45 = vector.broadcast %44 : vector<1x8x1xf32> to vector<1x8x8xf32>
    %46 = arith.subf %42, %45 : vector<1x8x8xf32>
    %47 = math.exp %46 : vector<1x8x8xf32>
    %cst_22 = arith.constant dense<0.000000e+00> : vector<1x8xf32>
    %48 = vector.multi_reduction <add>, %47, %cst_22 [2] : vector<1x8x8xf32> to vector<1x8xf32>
    %49 = vector.shape_cast %48 : vector<1x8xf32> to vector<1x8x1xf32>
    %50 = tpu.reciprocal %49 {approx = true} : vector<1x8x1xf32> -> vector<1x8x1xf32>
    %51 = vector.broadcast %50 : vector<1x8x1xf32> to vector<1x8x8xf32>
    %52 = arith.mulf %47, %51 : vector<1x8x8xf32>
    "tpu.trace_start"() <{level = 10 : i32, message = "bqk,bkd->bqd"}> : () -> ()
    %cst_23 = arith.constant dense<0.000000e+00> : vector<1x8x32xf32>
    %53 = tpu.matmul %52, %41, %cst_23 {dimension_numbers = #tpu.dot_dimension_numbers<[2], [1], [1], [2], [0, 0, 0, 1, 1, 2], [0], [0]>} : vector<1x8x8xf32>, vector<1x8x32xf32>, vector<1x8x32xf32> -> vector<1x8x32xf32>
    "tpu.trace_stop"() : () -> ()
    %54 = vector.shape_cast %53 : vector<1x8x32xf32> to vector<8x32xf32>
    %c0_24 = arith.constant 0 : index
    %c0_25 = arith.constant 0 : index
    %55 = vector.load %arg8[%c0_24, %c0_25] : memref<32x32xf32, #tpu.memory_space<vmem>>, vector<32x32xf32>
    %cst_26 = arith.constant dense<0.000000e+00> : vector<8x32xf32>
    %56 = tpu.matmul %54, %55, %cst_26 {dimension_numbers = #tpu.dot_dimension_numbers<[1], [0], [0], [1], [0, 0, 1, 1], [], []>} : vector<8x32xf32>, vector<32x32xf32>, vector<8x32xf32> -> vector<8x32xf32>
    %c0_27 = arith.constant 0 : index
    %c0_28 = arith.constant 0 : index
    %57 = vector.load %arg9[%c0_27, %c0_28] : memref<1x32xf32, #tpu.memory_space<vmem>>, vector<1x32xf32>
    %58 = vector.broadcast %57 : vector<1x32xf32> to vector<8x32xf32>
    %59 = arith.addf %56, %58 : vector<8x32xf32>
    %60 = arith.addf %6, %59 : vector<8x32xf32>
    %cst_29 = arith.constant dense<0.000000e+00> : vector<8xf32>
    %61 = vector.multi_reduction <add>, %60, %cst_29 [1] : vector<8x32xf32> to vector<8xf32>
    %62 = vector.shape_cast %61 : vector<8xf32> to vector<8x1xf32>
    %cst_30 = arith.constant 3.200000e+01 : f32
    %63 = vector.broadcast %cst_30 : f32 to vector<8x1xf32>
    %64 = arith.divf %62, %63 : vector<8x1xf32>
    %65 = vector.broadcast %64 : vector<8x1xf32> to vector<8x32xf32>
    %66 = arith.subf %60, %65 : vector<8x32xf32>
    %67 = arith.mulf %66, %66 : vector<8x32xf32>
    %cst_31 = arith.constant dense<0.000000e+00> : vector<8xf32>
    %68 = vector.multi_reduction <add>, %67, %cst_31 [1] : vector<8x32xf32> to vector<8xf32>
    %69 = vector.shape_cast %68 : vector<8xf32> to vector<8x1xf32>
    %cst_32 = arith.constant 3.200000e+01 : f32
    %70 = vector.broadcast %cst_32 : f32 to vector<8x1xf32>
    %71 = arith.divf %69, %70 : vector<8x1xf32>
    %72 = vector.broadcast %64 : vector<8x1xf32> to vector<8x32xf32>
    %73 = arith.subf %60, %72 : vector<8x32xf32>
    %cst_33 = arith.constant 9.99999974E-6 : f32
    %74 = vector.broadcast %cst_33 : f32 to vector<8x1xf32>
    %75 = arith.addf %71, %74 : vector<8x1xf32>
    %76 = math.rsqrt %75 : vector<8x1xf32>
    %77 = vector.broadcast %76 : vector<8x1xf32> to vector<8x32xf32>
    %78 = arith.mulf %73, %77 : vector<8x32xf32>
    %c0_34 = arith.constant 0 : index
    %c0_35 = arith.constant 0 : index
    %79 = vector.load %arg10[%c0_34, %c0_35] : memref<1x32xf32, #tpu.memory_space<vmem>>, vector<1x32xf32>
    %80 = vector.broadcast %79 : vector<1x32xf32> to vector<8x32xf32>
    %81 = arith.mulf %78, %80 : vector<8x32xf32>
    %c0_36 = arith.constant 0 : index
    %c0_37 = arith.constant 0 : index
    %82 = vector.load %arg11[%c0_36, %c0_37] : memref<1x32xf32, #tpu.memory_space<vmem>>, vector<1x32xf32>
    %83 = vector.broadcast %82 : vector<1x32xf32> to vector<8x32xf32>
    %84 = arith.addf %81, %83 : vector<8x32xf32>
    %c0_38 = arith.constant 0 : index
    %c0_39 = arith.constant 0 : index
    %85 = vector.load %arg12[%c0_38, %c0_39] : memref<32x64xf32, #tpu.memory_space<vmem>>, vector<32x64xf32>
    %cst_40 = arith.constant dense<0.000000e+00> : vector<8x64xf32>
    %86 = tpu.matmul %84, %85, %cst_40 {dimension_numbers = #tpu.dot_dimension_numbers<[1], [0], [0], [1], [0, 0, 1, 1], [], []>} : vector<8x32xf32>, vector<32x64xf32>, vector<8x64xf32> -> vector<8x64xf32>
    %c0_41 = arith.constant 0 : index
    %c0_42 = arith.constant 0 : index
    %87 = vector.load %arg13[%c0_41, %c0_42] : memref<1x64xf32, #tpu.memory_space<vmem>>, vector<1x64xf32>
    %88 = vector.broadcast %87 : vector<1x64xf32> to vector<8x64xf32>
    %89 = arith.addf %86, %88 : vector<8x64xf32>
    %cst_43 = arith.constant 0.000000e+00 : f32
    %90 = vector.broadcast %cst_43 : f32 to vector<8x64xf32>
    %91 = arith.maximumf %89, %90 : vector<8x64xf32>
    %c0_44 = arith.constant 0 : index
    %c0_45 = arith.constant 0 : index
    %92 = vector.load %arg14[%c0_44, %c0_45] : memref<64x32xf32, #tpu.memory_space<vmem>>, vector<64x32xf32>
    %cst_46 = arith.constant dense<0.000000e+00> : vector<8x32xf32>
    %93 = tpu.matmul %91, %92, %cst_46 {dimension_numbers = #tpu.dot_dimension_numbers<[1], [0], [0], [1], [0, 0, 1, 1], [], []>} : vector<8x64xf32>, vector<64x32xf32>, vector<8x32xf32> -> vector<8x32xf32>
    %c0_47 = arith.constant 0 : index
    %c0_48 = arith.constant 0 : index
    %94 = vector.load %arg15[%c0_47, %c0_48] : memref<1x32xf32, #tpu.memory_space<vmem>>, vector<1x32xf32>
    %95 = vector.broadcast %94 : vector<1x32xf32> to vector<8x32xf32>
    %96 = arith.addf %93, %95 : vector<8x32xf32>
    %97 = arith.addf %60, %96 : vector<8x32xf32>
    %98 = vector.shape_cast %97 : vector<8x32xf32> to vector<1x8x32xf32>
    %c0_49 = arith.constant 0 : index
    %c0_50 = arith.constant 0 : index
    %c0_51 = arith.constant 0 : index
    %99 = vector.load %arg19[%c0_49, %c0_50, %c0_51] : memref<1x8x32xf32, #tpu.memory_space<vmem>>, vector<1x8x32xf32>
    tpu.vector_store %arg19[%c0_49, %c0_50, %c0_51], %98 {strides = array<i32>} : memref<1x8x32xf32, #tpu.memory_space<vmem>>, vector<1x8x32xf32>,
    %100 = vector.extract_strided_slice %98 {offsets = [0, 7, 0], sizes = [1, 1, 32], strides = [1, 1, 1]} : vector<1x8x32xf32> to vector<1x1x32xf32>
    %101 = vector.shape_cast %100 : vector<1x1x32xf32> to vector<1x32xf32>
    %c0_52 = arith.constant 0 : index
    %c0_53 = arith.constant 0 : index
    %102 = vector.load %arg16[%c0_52, %c0_53] : memref<32x1xf32, #tpu.memory_space<vmem>>, vector<32x1xf32>
    %cst_54 = arith.constant dense<0.000000e+00> : vector<1x1xf32>
    %103 = tpu.matmul %101, %102, %cst_54 {dimension_numbers = #tpu.dot_dimension_numbers<[1], [0], [0], [1], [0, 0, 1, 1], [], []>} : vector<1x32xf32>, vector<32x1xf32>, vector<1x1xf32> -> vector<1x1xf32>
    %c0_55 = arith.constant 0 : index
    %c0_56 = arith.constant 0 : index
    %104 = vector.load %arg17[%c0_55, %c0_56] : memref<1x1xf32, #tpu.memory_space<vmem>>, vector<1x1xf32>
    %105 = arith.addf %103, %104 : vector<1x1xf32>
    %cst_57 = arith.constant 0.000000e+00 : f32
    %106 = vector.broadcast %cst_57 : f32 to vector<1x1xf32>
    %107 = arith.subf %106, %105 : vector<1x1xf32>
    %108 = math.exp %107 : vector<1x1xf32>
    %cst_58 = arith.constant 1.000000e+00 : f32
    %109 = vector.broadcast %cst_58 : f32 to vector<1x1xf32>
    %110 = arith.addf %109, %108 : vector<1x1xf32>
    %cst_59 = arith.constant 1.000000e+00 : f32
    %111 = vector.broadcast %cst_59 : f32 to vector<1x1xf32>
    %112 = arith.divf %111, %110 : vector<1x1xf32>
    %113 = vector.shape_cast %112 : vector<1x1xf32> to vector<1x1x1xf32>
    %c0_60 = arith.constant 0 : index
    %c0_61 = arith.constant 0 : index
    %c0_62 = arith.constant 0 : index
    %114 = vector.load %arg18[%c0_60, %c0_61, %c0_62] : memref<1x1x1xf32, #tpu.memory_space<vmem>>, vector<1x1x1xf32>
    tpu.vector_store %arg18[%c0_60, %c0_61, %c0_62], %113 {strides = array<i32>} : memref<1x1x1xf32, #tpu.memory_space<vmem>>, vector<1x1x1xf32>,
    return
  }
  func.func @transform_0(%arg0: i32) -> (i32, i32, i32) {
    %c0_i32 = arith.constant 0 : i32
    %c0_i32_0 = arith.constant 0 : i32
    %c0_i32_1 = arith.constant 0 : i32
    return %arg0, %c0_i32, %c0_i32_0 : i32, i32, i32
  }
  func.func @transform_1(%arg0: i32) -> (i32, i32) {
    %c0_i32 = arith.constant 0 : i32
    %c0_i32_0 = arith.constant 0 : i32
    %c0_i32_1 = arith.constant 0 : i32
    return %c0_i32, %c0_i32_0 : i32, i32
  }
  func.func @transform_2(%arg0: i32) -> (i32, i32) {
    %c0_i32 = arith.constant 0 : i32
    %c0_i32_0 = arith.constant 0 : i32
    %c0_i32_1 = arith.constant 0 : i32
    return %c0_i32, %c0_i32_0 : i32, i32
  }
  func.func @transform_3(%arg0: i32) -> (i32, i32) {
    %c0_i32 = arith.constant 0 : i32
    %c0_i32_0 = arith.constant 0 : i32
    %c0_i32_1 = arith.constant 0 : i32
    return %c0_i32, %c0_i32_0 : i32, i32
  }
  func.func @transform_4(%arg0: i32) -> (i32, i32) {
    %c0_i32 = arith.constant 0 : i32
    %c0_i32_0 = arith.constant 0 : i32
    %c0_i32_1 = arith.constant 0 : i32
    return %c0_i32, %c0_i32_0 : i32, i32
  }
  func.func @transform_5(%arg0: i32) -> (i32, i32) {
    %c0_i32 = arith.constant 0 : i32
    %c0_i32_0 = arith.constant 0 : i32
    %c0_i32_1 = arith.constant 0 : i32
    return %c0_i32, %c0_i32_0 : i32, i32
  }
  func.func @transform_6(%arg0: i32) -> (i32, i32) {
    %c0_i32 = arith.constant 0 : i32
    %c0_i32_0 = arith.constant 0 : i32
    %c0_i32_1 = arith.constant 0 : i32
    return %c0_i32, %c0_i32_0 : i32, i32
  }
  func.func @transform_7(%arg0: i32) -> (i32, i32) {
    %c0_i32 = arith.constant 0 : i32
    %c0_i32_0 = arith.constant 0 : i32
    %c0_i32_1 = arith.constant 0 : i32
    return %c0_i32, %c0_i32_0 : i32, i32
  }
  func.func @transform_8(%arg0: i32) -> (i32, i32) {
    %c0_i32 = arith.constant 0 : i32
    %c0_i32_0 = arith.constant 0 : i32
    %c0_i32_1 = arith.constant 0 : i32
    return %c0_i32, %c0_i32_0 : i32, i32
  }
  func.func @transform_9(%arg0: i32) -> (i32, i32) {
    %c0_i32 = arith.constant 0 : i32
    %c0_i32_0 = arith.constant 0 : i32
    %c0_i32_1 = arith.constant 0 : i32
    return %c0_i32, %c0_i32_0 : i32, i32
  }
  func.func @transform_10(%arg0: i32) -> (i32, i32) {
    %c0_i32 = arith.constant 0 : i32
    %c0_i32_0 = arith.constant 0 : i32
    %c0_i32_1 = arith.constant 0 : i32
    return %c0_i32, %c0_i32_0 : i32, i32
  }
  func.func @transform_11(%arg0: i32) -> (i32, i32) {
    %c0_i32 = arith.constant 0 : i32
    %c0_i32_0 = arith.constant 0 : i32
    %c0_i32_1 = arith.constant 0 : i32
    return %c0_i32, %c0_i32_0 : i32, i32
  }
  func.func @transform_12(%arg0: i32) -> (i32, i32) {
    %c0_i32 = arith.constant 0 : i32
    %c0_i32_0 = arith.constant 0 : i32
    %c0_i32_1 = arith.constant 0 : i32
    return %c0_i32, %c0_i32_0 : i32, i32
  }
  func.func @transform_13(%arg0: i32) -> (i32, i32) {
    %c0_i32 = arith.constant 0 : i32
    %c0_i32_0 = arith.constant 0 : i32
    %c0_i32_1 = arith.constant 0 : i32
    return %c0_i32, %c0_i32_0 : i32, i32
  }
  func.func @transform_14(%arg0: i32) -> (i32, i32) {
    %c0_i32 = arith.constant 0 : i32
    %c0_i32_0 = arith.constant 0 : i32
    %c0_i32_1 = arith.constant 0 : i32
    return %c0_i32, %c0_i32_0 : i32, i32
  }
  func.func @transform_15(%arg0: i32) -> (i32, i32) {
    %c0_i32 = arith.constant 0 : i32
    %c0_i32_0 = arith.constant 0 : i32
    %c0_i32_1 = arith.constant 0 : i32
    return %c0_i32, %c0_i32_0 : i32, i32
  }
  func.func @transform_16(%arg0: i32) -> (i32, i32) {
    %c0_i32 = arith.constant 0 : i32
    %c0_i32_0 = arith.constant 0 : i32
    %c0_i32_1 = arith.constant 0 : i32
    return %c0_i32, %c0_i32_0 : i32, i32
  }
  func.func @transform_17(%arg0: i32) -> (i32, i32, i32) {
    %c0_i32 = arith.constant 0 : i32
    %c0_i32_0 = arith.constant 0 : i32
    %c0_i32_1 = arith.constant 0 : i32
    return %arg0, %c0_i32, %c0_i32_0 : i32, i32, i32
  }
  func.func @transform_18(%arg0: i32) -> (i32, i32, i32) {
    %c0_i32 = arith.constant 0 : i32
    %c0_i32_0 = arith.constant 0 : i32
    %c0_i32_1 = arith.constant 0 : i32
    return %arg0, %c0_i32, %c0_i32_0 : i32, i32, i32
  }
}

</mosaic_0001>

<llo_original>
// kernel: tpu_custom_call.1
$region0: #{tpu_custom_call.1}
  #allocation0 [shape = 'u32[]', space=smem, size = 0x4, offset = 0x4, fixed_abs, tag = 'smem constant byte address 0x4 - core index']
  #allocation1 [shape = 'u32[72,128]{1,0:T(1,128)}', space=vmem, size = 0x9000, scoped, tag = 'internal scratch']
  #allocation2 [shape = 'f32[1,1]{1,0:T(1,128)S(1)}', space=vmem, size = 0x200, scoped, tag = 'scoped memory for tpu_custom_call.1']
  %s0 = inlined_call_operand.vmem [shape: f32[2,8,4], index: 0, kind: input, shape index: {}]
  %s1 = inlined_call_operand.vmem [shape: f32[4,32], index: 1, kind: input, shape index: {}]
  %s2 = inlined_call_operand.vmem [shape: f32[1,32], index: 2, kind: input, shape index: {}]
  %s3 = inlined_call_operand.vmem [shape: f32[1,32], index: 3, kind: input, shape index: {}]
  %s4 = inlined_call_operand.vmem [shape: f32[1,32], index: 4, kind: input, shape index: {}]
  %s5 = inlined_call_operand.vmem [shape: f32[32,96], index: 5, kind: input, shape index: {}]
  %s6 = inlined_call_operand.vmem [shape: f32[1,96], index: 6, kind: input, shape index: {}]
  %s7 = inlined_call_operand.vmem [shape: f32[32,32], index: 7, kind: input, shape index: {}]
  %s8 = inlined_call_operand.vmem [shape: f32[1,32], index: 8, kind: input, shape index: {}]
  %s9 = inlined_call_operand.vmem [shape: f32[1,32], index: 9, kind: input, shape index: {}]
  %s10 = inlined_call_operand.vmem [shape: f32[1,32], index: 10, kind: input, shape index: {}]
  %s11 = inlined_call_operand.vmem [shape: f32[32,64], index: 11, kind: input, shape index: {}]
  %s12 = inlined_call_operand.vmem [shape: f32[1,64], index: 12, kind: input, shape index: {}]
  %s13 = inlined_call_operand.vmem [shape: f32[64,32], index: 13, kind: input, shape index: {}]
  %s14 = inlined_call_operand.vmem [shape: f32[1,32], index: 14, kind: input, shape index: {}]
  %s15 = inlined_call_operand.vmem [shape: f32[32,1], index: 15, kind: input, shape index: {}]
  %s16 = inlined_call_operand.<no memory space> [shape: f32[1,1], index: 16, kind: input, shape index: {}]
  %s17 = inlined_call_operand.vmem [shape: f32[2,1,1], index: 17, kind: output, shape index: {0}]
  %s18 = inlined_call_operand.hbm [shape: f32[2,8,32], index: 18, kind: output, shape index: {1}]
  %19 = xla_tuple %s17, %s18
  %s20 = sld [smem:[#allocation0]]
  $region109: #{tpu_custom_call.1} parent=0
    _
  %s22 = ssub.s32 1, %s20
  %s23 = scalar_select 0, %s22, %s20
  %v24 = vstv %s16
  %25 = vst [vmem:[#allocation2] sm:$0x1] %v24
  $region1: #{tpu_custom_call.1} parent=0
    #allocation3 [shape = 'u8[8192]{0}', space=vmem, size = 0x2000, scoped, tag = 'output window, operand 1']
    #allocation4 [shape = 's32[2]{0}', space=sflag, size = 0x8, scoped, tag = 'scoped memory for tpu_custom_call.1']
    %26 = vsyncpa [#allocation4], 0
    %s27 = scalar_lea.sflag [#allocation4], 1
    %28 = vsyncpa %s27, 0
    loop: start=0, step=1, limit=4
    $region2: #{tpu_custom_call.1} parent=1 // loop_pre_header
      _
    $region3: #{tpu_custom_call.1} parent=1 // loop_header
      %s30 = sphi 0, %s34
      %p31 = scmp.ge.s32.totalorder %s30, 4
      %s40 = sphi 0, %s42
      %s43 = sphi 0, %s40
      %s44 = sphi 0, %s43
      %s60 = sphi 0, %s44
      %s64 = sphi 0, %s64
      %s66 = sphi 0, %s64
      %s67 = sphi 0, %s66
      %s81 = sphi 0, %s67
      %s85 = sphi 0, %s85
      %s87 = sphi 0, %s85
      %s88 = sphi 0, %s87
      %s102 = sphi 0, %s88
      %s106 = sphi 0, %s106
      %s108 = sphi 0, %s106
      %s109 = sphi 0, %s108
      %s123 = sphi 0, %s109
      %s127 = sphi 0, %s127
      %s129 = sphi 0, %s127
      %s130 = sphi 0, %s129
      %s144 = sphi 0, %s130
      %s148 = sphi 0, %s148
      %s150 = sphi 0, %s148
      %s151 = sphi 0, %s150
      %s165 = sphi 0, %s151
      %s169 = sphi 0, %s169
      %s171 = sphi 0, %s169
      %s172 = sphi 0, %s171
      %s186 = sphi 0, %s172
      %s190 = sphi 0, %s190
      %s192 = sphi 0, %s190
      %s193 = sphi 0, %s192
      %s207 = sphi 0, %s193
      %s211 = sphi 0, %s211
      %s213 = sphi 0, %s211
      %s214 = sphi 0, %s213
      %s228 = sphi 0, %s214
      %s232 = sphi 0, %s232
      %s234 = sphi 0, %s232
      %s235 = sphi 0, %s234
      %s249 = sphi 0, %s235
      %s253 = sphi 0, %s253
      %s255 = sphi 0, %s253
      %s256 = sphi 0, %s255
      %s270 = sphi 0, %s256
      %s274 = sphi 0, %s274
      %s276 = sphi 0, %s274
      %s277 = sphi 0, %s276
      %s291 = sphi 0, %s277
      %s295 = sphi 0, %s295
      %s297 = sphi 0, %s295
      %s298 = sphi 0, %s297
      %s312 = sphi 0, %s298
      %s316 = sphi 0, %s316
      %s318 = sphi 0, %s316
      %s319 = sphi 0, %s318
      %s333 = sphi 0, %s319
      %s337 = sphi 0, %s337
      %s339 = sphi 0, %s337
      %s340 = sphi 0, %s339
      %s354 = sphi 0, %s340
      %s358 = sphi 0, %s358
      %s360 = sphi 0, %s358
      %s361 = sphi 0, %s360
      %s375 = sphi 0, %s361
      %s379 = sphi 0, %s379
      %s381 = sphi 0, %s379
      %s382 = sphi 0, %s381
      %s396 = sphi 0, %s382
      %s402 = sphi 0, %s404
      %s405 = sphi 0, %s402
      %s406 = sphi 0, %s405
      %s422 = sphi 0, %s406
      %s428 = sphi 0, %s430
      %s431 = sphi 0, %s428
      %s432 = sphi 0, %s431
      %s448 = sphi 0, %s432
    $region4: #{tpu_custom_call.1} parent=1 // loop_header_branch
      %33 = sbr.rel (%p31) target = $region8
    $region5: #{tpu_custom_call.1} parent=1 // loop_body
      %s35 = ssub.s32 %s30, 1
      %s36 = ssub.s32 %s30, 2
      %s37 = sadd.s32 %s30, 1
      %s38 = ssub.s32 %s30, %s37
      %p39 = scmp.eq.s32.totalorder %s38, 0
      %s41 = sadd.s32 %s40, 1
      %s42 = scalar_select %p39, %s40, %s41
      %p45 = pneg %p39
      %p46 = scmp.eq.s32.totalorder %s30, 1
      %p47 = por %p45, %p46
      %p48 = scmp.ne.s32.totalorder %s40, %s43
      %p49 = scmp.eq.s32.totalorder %s30, 0
      %p50 = por %p48, %p49
      %p51 = scmp.ne.s32.totalorder %s40, %s43
      %p52 = scmp.eq.s32.totalorder %s35, 1
      %p53 = por %p51, %p52
      %p54 = scmp.ne.s32.totalorder %s43, %s44
      %p55 = scmp.eq.s32.totalorder %s35, 0
      %p56 = por %p54, %p55
      %p57 = scmp.ne.s32.totalorder %s43, %s44
      %p58 = scmp.eq.s32.totalorder %s36, 1
      %p59 = por %p57, %p58
      %p61 = scmp.ne.s32.totalorder %s44, %s60
      %p62 = scmp.eq.s32.totalorder %s36, 0
      %p63 = por %p61, %p62
      %s65 = sadd.s32 %s64, 1
      %p68 = scmp.eq.s32.totalorder %s30, 1
      %p69 = scmp.ne.s32.totalorder %s64, %s66
      %p70 = scmp.eq.s32.totalorder %s30, 0
      %p71 = por %p69, %p70
      %p72 = scmp.ne.s32.totalorder %s64, %s66
      %p73 = scmp.eq.s32.totalorder %s35, 1
      %p74 = por %p72, %p73
      %p75 = scmp.ne.s32.totalorder %s66, %s67
      %p76 = scmp.eq.s32.totalorder %s35, 0
      %p77 = por %p75, %p76
      %p78 = scmp.ne.s32.totalorder %s66, %s67
      %p79 = scmp.eq.s32.totalorder %s36, 1
      %p80 = por %p78, %p79
      %p82 = scmp.ne.s32.totalorder %s67, %s81
      %p83 = scmp.eq.s32.totalorder %s36, 0
      %p84 = por %p82, %p83
      %s86 = sadd.s32 %s85, 1
      %p89 = scmp.eq.s32.totalorder %s30, 1
      %p90 = scmp.ne.s32.totalorder %s85, %s87
      %p91 = scmp.eq.s32.totalorder %s30, 0
      %p92 = por %p90, %p91
      %p93 = scmp.ne.s32.totalorder %s85, %s87
      %p94 = scmp.eq.s32.totalorder %s35, 1
      %p95 = por %p93, %p94
      %p96 = scmp.ne.s32.totalorder %s87, %s88
      %p97 = scmp.eq.s32.totalorder %s35, 0
      %p98 = por %p96, %p97
      %p99 = scmp.ne.s32.totalorder %s87, %s88
      %p100 = scmp.eq.s32.totalorder %s36, 1
      %p101 = por %p99, %p100
      %p103 = scmp.ne.s32.totalorder %s88, %s102
      %p104 = scmp.eq.s32.totalorder %s36, 0
      %p105 = por %p103, %p104
      %s107 = sadd.s32 %s106, 1
      %p110 = scmp.eq.s32.totalorder %s30, 1
      %p111 = scmp.ne.s32.totalorder %s106, %s108
      %p112 = scmp.eq.s32.totalorder %s30, 0
      %p113 = por %p111, %p112
      %p114 = scmp.ne.s32.totalorder %s106, %s108
      %p115 = scmp.eq.s32.totalorder %s35, 1
      %p116 = por %p114, %p115
      %p117 = scmp.ne.s32.totalorder %s108, %s109
      %p118 = scmp.eq.s32.totalorder %s35, 0
      %p119 = por %p117, %p118
      %p120 = scmp.ne.s32.totalorder %s108, %s109
      %p121 = scmp.eq.s32.totalorder %s36, 1
      %p122 = por %p120, %p121
      %p124 = scmp.ne.s32.totalorder %s109, %s123
      %p125 = scmp.eq.s32.totalorder %s36, 0
      %p126 = por %p124, %p125
      %s128 = sadd.s32 %s127, 1
      %p131 = scmp.eq.s32.totalorder %s30, 1
      %p132 = scmp.ne.s32.totalorder %s127, %s129
      %p133 = scmp.eq.s32.totalorder %s30, 0
      %p134 = por %p132, %p133
      %p135 = scmp.ne.s32.totalorder %s127, %s129
      %p136 = scmp.eq.s32.totalorder %s35, 1
      %p137 = por %p135, %p136
      %p138 = scmp.ne.s32.totalorder %s129, %s130
      %p139 = scmp.eq.s32.totalorder %s35, 0
      %p140 = por %p138, %p139
      %p141 = scmp.ne.s32.totalorder %s129, %s130
      %p142 = scmp.eq.s32.totalorder %s36, 1
      %p143 = por %p141, %p142
      %p145 = scmp.ne.s32.totalorder %s130, %s144
      %p146 = scmp.eq.s32.totalorder %s36, 0
      %p147 = por %p145, %p146
      %s149 = sadd.s32 %s148, 1
      %p152 = scmp.eq.s32.totalorder %s30, 1
      %p153 = scmp.ne.s32.totalorder %s148, %s150
      %p154 = scmp.eq.s32.totalorder %s30, 0
      %p155 = por %p153, %p154
      %p156 = scmp.ne.s32.totalorder %s148, %s150
      %p157 = scmp.eq.s32.totalorder %s35, 1
      %p158 = por %p156, %p157
      %p159 = scmp.ne.s32.totalorder %s150, %s151
      %p160 = scmp.eq.s32.totalorder %s35, 0
      %p161 = por %p159, %p160
      %p162 = scmp.ne.s32.totalorder %s150, %s151
      %p163 = scmp.eq.s32.totalorder %s36, 1
      %p164 = por %p162, %p163
      %p166 = scmp.ne.s32.totalorder %s151, %s165
      %p167 = scmp.eq.s32.totalorder %s36, 0
      %p168 = por %p166, %p167
      %s170 = sadd.s32 %s169, 1
      %p173 = scmp.eq.s32.totalorder %s30, 1
      %p174 = scmp.ne.s32.totalorder %s169, %s171
      %p175 = scmp.eq.s32.totalorder %s30, 0
      %p176 = por %p174, %p175
      %p177 = scmp.ne.s32.totalorder %s169, %s171
      %p178 = scmp.eq.s32.totalorder %s35, 1
      %p179 = por %p177, %p178
      %p180 = scmp.ne.s32.totalorder %s171, %s172
      %p181 = scmp.eq.s32.totalorder %s35, 0
      %p182 = por %p180, %p181
      %p183 = scmp.ne.s32.totalorder %s171, %s172
      %p184 = scmp.eq.s32.totalorder %s36, 1
      %p185 = por %p183, %p184
      %p187 = scmp.ne.s32.totalorder %s172, %s186
      %p188 = scmp.eq.s32.totalorder %s36, 0
      %p189 = por %p187, %p188
      %s191 = sadd.s32 %s190, 1
      %p194 = scmp.eq.s32.totalorder %s30, 1
      %p195 = scmp.ne.s32.totalorder %s190, %s192
      %p196 = scmp.eq.s32.totalorder %s30, 0
      %p197 = por %p195, %p196
      %p198 = scmp.ne.s32.totalorder %s190, %s192
      %p199 = scmp.eq.s32.totalorder %s35, 1
      %p200 = por %p198, %p199
      %p201 = scmp.ne.s32.totalorder %s192, %s193
      %p202 = scmp.eq.s32.totalorder %s35, 0
      %p203 = por %p201, %p202
      %p204 = scmp.ne.s32.totalorder %s192, %s193
      %p205 = scmp.eq.s32.totalorder %s36, 1
      %p206 = por %p204, %p205
      %p208 = scmp.ne.s32.totalorder %s193, %s207
      %p209 = scmp.eq.s32.totalorder %s36, 0
      %p210 = por %p208, %p209
      %s212 = sadd.s32 %s211, 1
      %p215 = scmp.eq.s32.totalorder %s30, 1
      %p216 = scmp.ne.s32.totalorder %s211, %s213
      %p217 = scmp.eq.s32.totalorder %s30, 0
      %p218 = por %p216, %p217
      %p219 = scmp.ne.s32.totalorder %s211, %s213
      %p220 = scmp.eq.s32.totalorder %s35, 1
      %p221 = por %p219, %p220
      %p222 = scmp.ne.s32.totalorder %s213, %s214
      %p223 = scmp.eq.s32.totalorder %s35, 0
      %p224 = por %p222, %p223
      %p225 = scmp.ne.s32.totalorder %s213, %s214
      %p226 = scmp.eq.s32.totalorder %s36, 1
      %p227 = por %p225, %p226
      %p229 = scmp.ne.s32.totalorder %s214, %s228
      %p230 = scmp.eq.s32.totalorder %s36, 0
      %p231 = por %p229, %p230
      %s233 = sadd.s32 %s232, 1
      %p236 = scmp.eq.s32.totalorder %s30, 1
      %p237 = scmp.ne.s32.totalorder %s232, %s234
      %p238 = scmp.eq.s32.totalorder %s30, 0
      %p239 = por %p237, %p238
      %p240 = scmp.ne.s32.totalorder %s232, %s234
      %p241 = scmp.eq.s32.totalorder %s35, 1
      %p242 = por %p240, %p241
      %p243 = scmp.ne.s32.totalorder %s234, %s235
      %p244 = scmp.eq.s32.totalorder %s35, 0
      %p245 = por %p243, %p244
      %p246 = scmp.ne.s32.totalorder %s234, %s235
      %p247 = scmp.eq.s32.totalorder %s36, 1
      %p248 = por %p246, %p247
      %p250 = scmp.ne.s32.totalorder %s235, %s249
      %p251 = scmp.eq.s32.totalorder %s36, 0
      %p252 = por %p250, %p251
      %s254 = sadd.s32 %s253, 1
      %p257 = scmp.eq.s32.totalorder %s30, 1
      %p258 = scmp.ne.s32.totalorder %s253, %s255
      %p259 = scmp.eq.s32.totalorder %s30, 0
      %p260 = por %p258, %p259
      %p261 = scmp.ne.s32.totalorder %s253, %s255
      %p262 = scmp.eq.s32.totalorder %s35, 1
      %p263 = por %p261, %p262
      %p264 = scmp.ne.s32.totalorder %s255, %s256
      %p265 = scmp.eq.s32.totalorder %s35, 0
      %p266 = por %p264, %p265
      %p267 = scmp.ne.s32.totalorder %s255, %s256
      %p268 = scmp.eq.s32.totalorder %s36, 1
      %p269 = por %p267, %p268
      %p271 = scmp.ne.s32.totalorder %s256, %s270
      %p272 = scmp.eq.s32.totalorder %s36, 0
      %p273 = por %p271, %p272
      %s275 = sadd.s32 %s274, 1
      %p278 = scmp.eq.s32.totalorder %s30, 1
      %p279 = scmp.ne.s32.totalorder %s274, %s276
      %p280 = scmp.eq.s32.totalorder %s30, 0
      %p281 = por %p279, %p280
      %p282 = scmp.ne.s32.totalorder %s274, %s276
      %p283 = scmp.eq.s32.totalorder %s35, 1
      %p284 = por %p282, %p283
      %p285 = scmp.ne.s32.totalorder %s276, %s277
      %p286 = scmp.eq.s32.totalorder %s35, 0
      %p287 = por %p285, %p286
      %p288 = scmp.ne.s32.totalorder %s276, %s277
      %p289 = scmp.eq.s32.totalorder %s36, 1
      %p290 = por %p288, %p289
      %p292 = scmp.ne.s32.totalorder %s277, %s291
      %p293 = scmp.eq.s32.totalorder %s36, 0
      %p294 = por %p292, %p293
      %s296 = sadd.s32 %s295, 1
      %p299 = scmp.eq.s32.totalorder %s30, 1
      %p300 = scmp.ne.s32.totalorder %s295, %s297
      %p301 = scmp.eq.s32.totalorder %s30, 0
      %p302 = por %p300, %p301
      %p303 = scmp.ne.s32.totalorder %s295, %s297
      %p304 = scmp.eq.s32.totalorder %s35, 1
      %p305 = por %p303, %p304
      %p306 = scmp.ne.s32.totalorder %s297, %s298
      %p307 = scmp.eq.s32.totalorder %s35, 0
      %p308 = por %p306, %p307
      %p309 = scmp.ne.s32.totalorder %s297, %s298
      %p310 = scmp.eq.s32.totalorder %s36, 1
      %p311 = por %p309, %p310
      %p313 = scmp.ne.s32.totalorder %s298, %s312
      %p314 = scmp.eq.s32.totalorder %s36, 0
      %p315 = por %p313, %p314
      %s317 = sadd.s32 %s316, 1
      %p320 = scmp.eq.s32.totalorder %s30, 1
      %p321 = scmp.ne.s32.totalorder %s316, %s318
      %p322 = scmp.eq.s32.totalorder %s30, 0
      %p323 = por %p321, %p322
      %p324 = scmp.ne.s32.totalorder %s316, %s318
      %p325 = scmp.eq.s32.totalorder %s35, 1
      %p326 = por %p324, %p325
      %p327 = scmp.ne.s32.totalorder %s318, %s319
      %p328 = scmp.eq.s32.totalorder %s35, 0
      %p329 = por %p327, %p328
      %p330 = scmp.ne.s32.totalorder %s318, %s319
      %p331 = scmp.eq.s32.totalorder %s36, 1
      %p332 = por %p330, %p331
      %p334 = scmp.ne.s32.totalorder %s319, %s333
      %p335 = scmp.eq.s32.totalorder %s36, 0
      %p336 = por %p334, %p335
      %s338 = sadd.s32 %s337, 1
      %p341 = scmp.eq.s32.totalorder %s30, 1
      %p342 = scmp.ne.s32.totalorder %s337, %s339
      %p343 = scmp.eq.s32.totalorder %s30, 0
      %p344 = por %p342, %p343
      %p345 = scmp.ne.s32.totalorder %s337, %s339
      %p346 = scmp.eq.s32.totalorder %s35, 1
      %p347 = por %p345, %p346
      %p348 = scmp.ne.s32.totalorder %s339, %s340
      %p349 = scmp.eq.s32.totalorder %s35, 0
      %p350 = por %p348, %p349
      %p351 = scmp.ne.s32.totalorder %s339, %s340
      %p352 = scmp.eq.s32.totalorder %s36, 1
      %p353 = por %p351, %p352
      %p355 = scmp.ne.s32.totalorder %s340, %s354
      %p356 = scmp.eq.s32.totalorder %s36, 0
      %p357 = por %p355, %p356
      %s359 = sadd.s32 %s358, 1
      %p362 = scmp.eq.s32.totalorder %s30, 1
      %p363 = scmp.ne.s32.totalorder %s358, %s360
      %p364 = scmp.eq.s32.totalorder %s30, 0
      %p365 = por %p363, %p364
      %p366 = scmp.ne.s32.totalorder %s358, %s360
      %p367 = scmp.eq.s32.totalorder %s35, 1
      %p368 = por %p366, %p367
      %p369 = scmp.ne.s32.totalorder %s360, %s361
      %p370 = scmp.eq.s32.totalorder %s35, 0
      %p371 = por %p369, %p370
      %p372 = scmp.ne.s32.totalorder %s360, %s361
      %p373 = scmp.eq.s32.totalorder %s36, 1
      %p374 = por %p372, %p373
      %p376 = scmp.ne.s32.totalorder %s361, %s375
      %p377 = scmp.eq.s32.totalorder %s36, 0
      %p378 = por %p376, %p377
      %s380 = sadd.s32 %s379, 1
      %p383 = scmp.eq.s32.totalorder %s30, 1
      %p384 = scmp.ne.s32.totalorder %s379, %s381
      %p385 = scmp.eq.s32.totalorder %s30, 0
      %p386 = por %p384, %p385
      %p387 = scmp.ne.s32.totalorder %s379, %s381
      %p388 = scmp.eq.s32.totalorder %s35, 1
      %p389 = por %p387, %p388
      %p390 = scmp.ne.s32.totalorder %s381, %s382
      %p391 = scmp.eq.s32.totalorder %s35, 0
      %p392 = por %p390, %p391
      %p393 = scmp.ne.s32.totalorder %s381, %s382
      %p394 = scmp.eq.s32.totalorder %s36, 1
      %p395 = por %p393, %p394
      %p397 = scmp.ne.s32.totalorder %s382, %s396
      %p398 = scmp.eq.s32.totalorder %s36, 0
      %p399 = por %p397, %p398
      %s400 = ssub.s32 %s30, %s37
      %p401 = scmp.eq.s32.totalorder %s400, 0
      %s403 = sadd.s32 %s402, 1
      %s404 = scalar_select %p401, %s402, %s403
      %p407 = pneg %p401
      %p408 = scmp.eq.s32.totalorder %s30, 1
      %p409 = por %p407, %p408
      %p410 = scmp.ne.s32.totalorder %s402, %s405
      %p411 = scmp.eq.s32.totalorder %s30, 0
      %p412 = por %p410, %p411
      %p413 = scmp.ne.s32.totalorder %s402, %s405
      %p414 = scmp.eq.s32.totalorder %s35, 1
      %p415 = por %p413, %p414
      %p416 = scmp.ne.s32.totalorder %s405, %s406
      %p417 = scmp.eq.s32.totalorder %s35, 0
      %p418 = por %p416, %p417
      %p419 = scmp.ne.s32.totalorder %s405, %s406
      %p420 = scmp.eq.s32.totalorder %s36, 1
      %p421 = por %p419, %p420
      %p423 = scmp.ne.s32.totalorder %s406, %s422
      %p424 = scmp.eq.s32.totalorder %s36, 0
      %p425 = por %p423, %p424
      %s426 = ssub.s32 %s30, %s37
      %p427 = scmp.eq.s32.totalorder %s426, 0
      %s429 = sadd.s32 %s428, 1
      %s430 = scalar_select %p427, %s428, %s429
      %p433 = pneg %p427
      %p434 = scmp.eq.s32.totalorder %s30, 1
      %p435 = por %p433, %p434
      %p436 = scmp.ne.s32.totalorder %s428, %s431
      %p437 = scmp.eq.s32.totalorder %s30, 0
      %p438 = por %p436, %p437
      %p439 = scmp.ne.s32.totalorder %s428, %s431
      %p440 = scmp.eq.s32.totalorder %s35, 1
      %p441 = por %p439, %p440
      %p442 = scmp.ne.s32.totalorder %s431, %s432
      %p443 = scmp.eq.s32.totalorder %s35, 0
      %p444 = por %p442, %p443
      %p445 = scmp.ne.s32.totalorder %s431, %s432
      %p446 = scmp.eq.s32.totalorder %s36, 1
      %p447 = por %p445, %p446
      %p449 = scmp.ne.s32.totalorder %s432, %s448
      %p450 = scmp.eq.s32.totalorder %s36, 0
      %p451 = por %p449, %p450
      %p452 = scmp.le.s32.totalorder 1, %s30
      %p453 = scmp.lt.s32.totalorder %s30, 3
      %p454 = pnand %p452, %p453
      %p455 = pneg %p454
      // Predicated region
      $region9: #{tpu_custom_call.1} parent=5 // pred_check
        _
      $region10: #{tpu_custom_call.1} parent=5 // pred_check_branch
        %457 = sbr.rel (%p454) target = $region12
      $region11: #{tpu_custom_call.1} parent=5 // pred_region
        %s458 = ssub.s32 %s30, 1
        // Predicated region
        $region13: #{tpu_custom_call.1} parent=11 // pred_check
          %p459 = pneg %p77
        $region14: #{tpu_custom_call.1} parent=11 // pred_check_branch
          %461 = sbr.rel (%p459) target = $region16
        $region15: #{tpu_custom_call.1} parent=11 // pred_region
          _
        $region16: #{tpu_custom_call.1} parent=11 // pred_fallthru
          _
        // Predicated region
        $region17: #{tpu_custom_call.1} parent=11 // pred_check
          %p462 = pneg %p98
        $region18: #{tpu_custom_call.1} parent=11 // pred_check_branch
          %464 = sbr.rel (%p462) target = $region20
        $region19: #{tpu_custom_call.1} parent=11 // pred_region
          _
        $region20: #{tpu_custom_call.1} parent=11 // pred_fallthru
          _
        // Predicated region
        $region21: #{tpu_custom_call.1} parent=11 // pred_check
          %p465 = pneg %p119
        $region22: #{tpu_custom_call.1} parent=11 // pred_check_branch
          %467 = sbr.rel (%p465) target = $region24
        $region23: #{tpu_custom_call.1} parent=11 // pred_region
          _
        $region24: #{tpu_custom_call.1} parent=11 // pred_fallthru
          _
        // Predicated region
        $region25: #{tpu_custom_call.1} parent=11 // pred_check
          %p468 = pneg %p140
        $region26: #{tpu_custom_call.1} parent=11 // pred_check_branch
          %470 = sbr.rel (%p468) target = $region28
        $region27: #{tpu_custom_call.1} parent=11 // pred_region
          _
        $region28: #{tpu_custom_call.1} parent=11 // pred_fallthru
          _
        // Predicated region
        $region29: #{tpu_custom_call.1} parent=11 // pred_check
          %p471 = pneg %p161
        $region30: #{tpu_custom_call.1} parent=11 // pred_check_branch
          %473 = sbr.rel (%p471) target = $region32
        $region31: #{tpu_custom_call.1} parent=11 // pred_region
          _
        $region32: #{tpu_custom_call.1} parent=11 // pred_fallthru
          _
        // Predicated region
        $region33: #{tpu_custom_call.1} parent=11 // pred_check
          %p474 = pneg %p182
        $region34: #{tpu_custom_call.1} parent=11 // pred_check_branch
          %476 = sbr.rel (%p474) target = $region36
        $region35: #{tpu_custom_call.1} parent=11 // pred_region
          _
        $region36: #{tpu_custom_call.1} parent=11 // pred_fallthru
          _
        // Predicated region
        $region37: #{tpu_custom_call.1} parent=11 // pred_check
          %p477 = pneg %p203
        $region38: #{tpu_custom_call.1} parent=11 // pred_check_branch
          %479 = sbr.rel (%p477) target = $region40
        $region39: #{tpu_custom_call.1} parent=11 // pred_region
          _
        $region40: #{tpu_custom_call.1} parent=11 // pred_fallthru
          _
        // Predicated region
        $region41: #{tpu_custom_call.1} parent=11 // pred_check
          %p480 = pneg %p224
        $region42: #{tpu_custom_call.1} parent=11 // pred_check_branch
          %482 = sbr.rel (%p480) target = $region44
        $region43: #{tpu_custom_call.1} parent=11 // pred_region
          _
        $region44: #{tpu_custom_call.1} parent=11 // pred_fallthru
          _
        // Predicated region
        $region45: #{tpu_custom_call.1} parent=11 // pred_check
          %p483 = pneg %p245
        $region46: #{tpu_custom_call.1} parent=11 // pred_check_branch
          %485 = sbr.rel (%p483) target = $region48
        $region47: #{tpu_custom_call.1} parent=11 // pred_region
          _
        $region48: #{tpu_custom_call.1} parent=11 // pred_fallthru
          _
        // Predicated region
        $region49: #{tpu_custom_call.1} parent=11 // pred_check
          %p486 = pneg %p266
        $region50: #{tpu_custom_call.1} parent=11 // pred_check_branch
          %488 = sbr.rel (%p486) target = $region52
        $region51: #{tpu_custom_call.1} parent=11 // pred_region
          _
        $region52: #{tpu_custom_call.1} parent=11 // pred_fallthru
          _
        // Predicated region
        $region53: #{tpu_custom_call.1} parent=11 // pred_check
          %p489 = pneg %p287
        $region54: #{tpu_custom_call.1} parent=11 // pred_check_branch
          %491 = sbr.rel (%p489) target = $region56
        $region55: #{tpu_custom_call.1} parent=11 // pred_region
          _
        $region56: #{tpu_custom_call.1} parent=11 // pred_fallthru
          _
        // Predicated region
        $region57: #{tpu_custom_call.1} parent=11 // pred_check
          %p492 = pneg %p308
        $region58: #{tpu_custom_call.1} parent=11 // pred_check_branch
          %494 = sbr.rel (%p492) target = $region60
        $region59: #{tpu_custom_call.1} parent=11 // pred_region
          _
        $region60: #{tpu_custom_call.1} parent=11 // pred_fallthru
          _
        // Predicated region
        $region61: #{tpu_custom_call.1} parent=11 // pred_check
          %p495 = pneg %p329
        $region62: #{tpu_custom_call.1} parent=11 // pred_check_branch
          %497 = sbr.rel (%p495) target = $region64
        $region63: #{tpu_custom_call.1} parent=11 // pred_region
          _
        $region64: #{tpu_custom_call.1} parent=11 // pred_fallthru
          _
        // Predicated region
        $region65: #{tpu_custom_call.1} parent=11 // pred_check
          %p498 = pneg %p350
        $region66: #{tpu_custom_call.1} parent=11 // pred_check_branch
          %500 = sbr.rel (%p498) target = $region68
        $region67: #{tpu_custom_call.1} parent=11 // pred_region
          _
        $region68: #{tpu_custom_call.1} parent=11 // pred_fallthru
          _
        // Predicated region
        $region69: #{tpu_custom_call.1} parent=11 // pred_check
          %p501 = pneg %p371
        $region70: #{tpu_custom_call.1} parent=11 // pred_check_branch
          %503 = sbr.rel (%p501) target = $region72
        $region71: #{tpu_custom_call.1} parent=11 // pred_region
          _
        $region72: #{tpu_custom_call.1} parent=11 // pred_fallthru
          _
        // Predicated region
        $region73: #{tpu_custom_call.1} parent=11 // pred_check
          %p504 = pneg %p392
        $region74: #{tpu_custom_call.1} parent=11 // pred_check_branch
          %506 = sbr.rel (%p504) target = $region76
        $region75: #{tpu_custom_call.1} parent=11 // pred_region
          _
        $region76: #{tpu_custom_call.1} parent=11 // pred_fallthru
          _
      $region12: #{tpu_custom_call.1} parent=5 // pred_fallthru
        _
      %p507 = scmp.lt.s32.totalorder %s30, 2
      // Predicated region
      $region77: #{tpu_custom_call.1} parent=5 // pred_check
        %p508 = pneg %p507
      $region78: #{tpu_custom_call.1} parent=5 // pred_check_branch
        %510 = sbr.rel (%p508) target = $region80
      $region79: #{tpu_custom_call.1} parent=5 // pred_region
        // Predicated region
        $region81: #{tpu_custom_call.1} parent=79 // pred_check
          %p511 = pneg %p50
        $region82: #{tpu_custom_call.1} parent=79 // pred_check_branch
          %513 = sbr.rel (%p511) target = $region84
        $region83: #{tpu_custom_call.1} parent=79 // pred_region
          %p514 = scmp.lt.s32.totalorder %s30, 1
          %s515 = scalar_select %p514, %s30, 1
          %s516 = smul.addr %s515, 8
          %s517 = scalar_lea.vmem %s0, %s516
        $region84: #{tpu_custom_call.1} parent=79 // pred_fallthru
          _
      $region80: #{tpu_custom_call.1} parent=5 // pred_fallthru
        _
      %p518 = scmp.le.s32.totalorder 1, %s30
      %p519 = scmp.lt.s32.totalorder %s30, 3
      %p520 = pnand %p518, %p519
      %p521 = pneg %p520
      // Predicated region
      $region85: #{tpu_custom_call.1} parent=5 // pred_check
        _
      $region86: #{tpu_custom_call.1} parent=5 // pred_check_branch
        %523 = sbr.rel (%p520) target = $region88
      $region87: #{tpu_custom_call.1} parent=5 // pred_region
        %s524 = ssub.s32 %s30, 1
        %p525 = scmp.lt.s32.totalorder %s35, 1
        %s526 = scalar_select %p525, %s35, 1
        %s527 = smul.addr %s526, 8
        %s528 = scalar_lea.vmem %s0, %s527
        %p529 = pneg %p56
        %p530 = pneg %p53
        %p531 = pneg %p77
        %p532 = pneg %p74
        %p533 = pneg %p98
        %p534 = pneg %p95
        %p535 = pneg %p119
        %p536 = pneg %p116
        %p537 = pneg %p140
        %p538 = pneg %p137
        %p539 = pneg %p161
        %p540 = pneg %p158
        %p541 = pneg %p182
        %p542 = pneg %p179
        %p543 = pneg %p203
        %p544 = pneg %p200
        %p545 = pneg %p224
        %p546 = pneg %p221
        %p547 = pneg %p245
        %p548 = pneg %p242
        %p549 = pneg %p266
        %p550 = pneg %p263
        %p551 = pneg %p287
        %p552 = pneg %p284
        %p553 = pneg %p308
        %p554 = pneg %p305
        %p555 = pneg %p329
        %p556 = pneg %p326
        %p557 = pneg %p350
        %p558 = pneg %p347
        %p559 = pneg %p371
        %p560 = pneg %p368
        %p561 = pneg %p392
        %p562 = pneg %p389
        %p563 = pneg %p418
        %p564 = pneg %p415
        %p565 = scmp.lt.s32.totalorder %s35, 1
        %s566 = scalar_select %p565, %s35, 1
        %s567 = scalar_lea.vmem %s17, %s566
        %p568 = pneg %p444
        %p569 = pneg %p441
        %s570 = sand.u32 %s431, 1
        %s571 = scalar_lea.sflag [#allocation4], %s570
        %s572 = sand.u32 %s431, 1
        %s573 = smul.addr %s572, 8
        %s574 = scalar_lea.vmem [#allocation3], %s573
        %p575 = scmp.lt.s32.totalorder %s35, 1
        %s576 = scalar_select %p575, %s35, 1
        %s577 = smul.addr %s576, 8
        %s578 = scalar_lea.vmem %s0, %s577
        %p579 = scmp.lt.s32.totalorder %s35, 1
        %s580 = scalar_select %p579, %s35, 1
        %s581 = scalar_lea.vmem %s17, %s580
        %v582 = vld [vmem:[%s578] sm:$0xff]
        %v583 = vld [vmem:[%s1] sm:$0xf]
        %v584 = vld [vmem:[%s2] sm:$0x1]
        %v586 = vperm.slane %v584, 0
        %vm588 = vcmask 31744
        %v590 = vsel %vm588, %v582, 0
        %vm592 = vcmask 1043456
        %v594 = vsel %vm592, %v583, 0
        %596 = vmatpush.msra.mxu0 0.0
        %597 = vmatpush.msra.mxu0 0.0
        %598 = vmatpush.msra.mxu0 0.0
        %599 = vmatpush.msra.mxu0 0.0
        %600 = vmatpush.msra.mxu0 0.0
        %601 = vmatpush.msra.mxu0 0.0
        %602 = vmatpush.msra.mxu0 0.0
        %603 = vmatpush.msra.mxu0 0.0
        %604 = vmatpush.msra.mxu0 0.0
        %605 = vmatpush.msra.mxu0 0.0
        %606 = vmatpush.msra.mxu0 0.0
        %607 = vmatpush.msra.mxu0 0.0
        %608 = vmatpush.msra.mxu0 0.0
        %609 = vmatpush.msra.mxu0 0.0
        %610 = vmatpush.msra.mxu0 0.0
        %611 = vmatpush.msra.mxu0 %v594
        %612 = vmatmul.f32.gmra.mxu0 %v590
        %v613 = vpop.f32.mrf.mxu0
        %v614 = vadd.f32 %v586, %v613
        %615 = vdwg.mxu0
        %vm616 = vcmask 261120
        %v617 = vsel %vm616, %v614, 0.0
        %618 = vadd.xlane.f32.xlu0 %v617
        %v619 = vpop.xlane.xlu0 %618
        %v620 = vrcp.pop 32.0
        %v621 = vmul.f32 32.0, %v620
        %v622 = vsub.f32 1.0, %v621
        %v623 = vmul.f32 %v620, %v622
        %v624 = vadd.f32 %v620, %v623
        %vm625 = vweird.f32 %v620
        %v626 = vsel %vm625, %v620, %v624
        %v627 = vmul.f32 %v619, %v626
        %v628 = vsub.f32 %v614, %v627
        %v629 = vmul.f32 %v628, %v628
        %v630 = vsel %vm616, %v629, 0.0
        %631 = vadd.xlane.f32.xlu0 %v630
        %v632 = vpop.xlane.xlu0 %631
        %v633 = vmul.f32 %v632, %v626
        %v634 = vadd.f32 %v633, 1e-05
        %v635 = vrsqrt.pop %v634
        %v636 = vmul.f32 %v635, %v634
        %v637 = vmul.f32 %v636, %v635
        %v638 = vmul.f32 0.5, %v637
        %v639 = vsub.f32 1.5, %v638
        %v640 = vmul.f32 %v635, %v639
        %vm641 = vweird.f32 %v634
        %vm642 = vweird.f32 %v635
        %vm643 = vmor %vm641, %vm642
        %v644 = vsel %vm643, %v635, %v640
        %v645 = vmul.f32 %v628, %v644
        %v646 = vld [vmem:[%s3] sm:$0x1]
        %v648 = vperm.slane %v646, 0
        %v650 = vmul.f32 %v645, %v648
        %v651 = vld [vmem:[%s4] sm:$0x1]
        %v653 = vperm.slane %v651, 0
        %v655 = vadd.f32 %v650, %v653
        %v656 = vld [vmem:[%s5] sm:$0xff]
        %v657 = vld [vmem:[%s5 + $0x8] sm:$0xff]
        %v658 = vld [vmem:[%s5 + $0x10] sm:$0xff]
        %v659 = vld [vmem:[%s5 + $0x18] sm:$0xff]
        %v660 = vld [vmem:[%s6] sm:$0x1]
        %v662 = vperm.slane %v660, 0
        %v665 = vsel %vm616, %v655, 0
        %667 = vmatpush.msra.mxu0 0.0
        %668 = vmatpush.msra.mxu0 0.0
        %669 = vmatpush.msra.mxu0 0.0
        %670 = vmatpush.msra.mxu0 0.0
        %671 = vmatpush.msra.mxu0 0.0
        %672 = vmatpush.msra.mxu0 0.0
        %673 = vmatpush.msra.mxu0 0.0
        %674 = vmatpush.msra.mxu0 0.0
        %675 = vmatpush.msra.mxu0 0.0
        %676 = vmatpush.msra.mxu0 0.0
        %677 = vmatpush.msra.mxu0 0.0
        %678 = vmatpush.msra.mxu0 0.0
        %679 = vmatpush.msra.mxu0 %v659
        %680 = vmatpush.msra.mxu0 %v658
        %681 = vmatpush.msra.mxu0 %v657
        %682 = vmatpush.msra.mxu0 %v656
        %683 = vmatmul.f32.gmra.mxu0 %v665
        %v684 = vpop.f32.mrf.mxu0
        %v685 = vadd.f32 %v662, %v684
        %686 = vdwg.mxu0
        %688 = vrot.lane.b32.xlu0 %v685, 96
        %v689 = vpop.permute.xlu0 %688
        %v690 = vsel %vm616, %v685, 0
        %v692 = vsel %vm616, %v689, 0
        %694 = vmatpush.xpose.msra.mxu0 0.0
        %695 = vmatpush.xpose.msra.mxu0 0.0
        %696 = vmatpush.xpose.msra.mxu0 0.0
        %697 = vmatpush.xpose.msra.mxu0 0.0
        %698 = vmatpush.xpose.msra.mxu0 0.0
        %699 = vmatpush.xpose.msra.mxu0 0.0
        %700 = vmatpush.xpose.msra.mxu0 0.0
        %701 = vmatpush.xpose.msra.mxu0 0.0
        %702 = vmatpush.xpose.msra.mxu0 0.0
        %703 = vmatpush.xpose.msra.mxu0 0.0
        %704 = vmatpush.xpose.msra.mxu0 0.0
        %705 = vmatpush.xpose.msra.mxu0 0.0
        %706 = vmatpush.xpose.msra.mxu0 0.0
        %707 = vmatpush.xpose.msra.mxu0 0.0
        %708 = vmatpush.xpose.msra.mxu0 0.0
        %709 = vmatpush.xpose.msra.mxu0 %v692
        %710 = vmatmul.f32.gmra.mxu0 %v690
        %v711 = vpop.f32.mrf.mxu0
        %v712 = vadd.f32 0.0, %v711
        %713 = vdwg.mxu0
        %vm714 = vcmask 64512
        %v715 = vsel %vm714, %v712, -inf
        %716 = vmax.xlane.f32.xlu0 %v715
        %v717 = vpop.xlane.xlu0 %716
        %v718 = vsub.f32 %v712, %v717
        %v719 = vmul.f32 %v718, 1.442695
        %v720 = vpow.pop %v719
        %v721 = vsel %vm714, %v720, 0.0
        %722 = vadd.xlane.f32.xlu0 %v721
        %v723 = vpop.xlane.xlu0 %722
        %v724 = vrcp.pop %v723
        %v725 = vmul.f32 %v720, %v724
        %726 = vrot.lane.b32.xlu0 %v685, 64
        %v727 = vpop.permute.xlu0 %726
        %v730 = vsel %vm714, %v725, 0
        %732 = vmatpush.msra.mxu0 0.0
        %733 = vmatpush.msra.mxu0 0.0
        %734 = vmatpush.msra.mxu0 0.0
        %735 = vmatpush.msra.mxu0 0.0
        %736 = vmatpush.msra.mxu0 0.0
        %737 = vmatpush.msra.mxu0 0.0
        %738 = vmatpush.msra.mxu0 0.0
        %739 = vmatpush.msra.mxu0 0.0
        %740 = vmatpush.msra.mxu0 0.0
        %741 = vmatpush.msra.mxu0 0.0
        %742 = vmatpush.msra.mxu0 0.0
        %743 = vmatpush.msra.mxu0 0.0
        %744 = vmatpush.msra.mxu0 0.0
        %745 = vmatpush.msra.mxu0 0.0
        %746 = vmatpush.msra.mxu0 0.0
        %747 = vmatpush.msra.mxu0 %v727
        %748 = vmatmul.f32.gmra.mxu0 %v730
        %v749 = vpop.f32.mrf.mxu0
        %v750 = vadd.f32 0.0, %v749
        %751 = vdwg.mxu0
        %v752 = vld [vmem:[%s7] sm:$0xff]
        %v753 = vld [vmem:[%s7 + $0x8] sm:$0xff]
        %v754 = vld [vmem:[%s7 + $0x10] sm:$0xff]
        %v755 = vld [vmem:[%s7 + $0x18] sm:$0xff]
        %v756 = vld [vmem:[%s8] sm:$0x1]
        %v758 = vperm.slane %v756, 0
        %v761 = vsel %vm616, %v750, 0
        %763 = vmatpush.msra.mxu0 0.0
        %764 = vmatpush.msra.mxu0 0.0
        %765 = vmatpush.msra.mxu0 0.0
        %766 = vmatpush.msra.mxu0 0.0
        %767 = vmatpush.msra.mxu0 0.0
        %768 = vmatpush.msra.mxu0 0.0
        %769 = vmatpush.msra.mxu0 0.0
        %770 = vmatpush.msra.mxu0 0.0
        %771 = vmatpush.msra.mxu0 0.0
        %772 = vmatpush.msra.mxu0 0.0
        %773 = vmatpush.msra.mxu0 0.0
        %774 = vmatpush.msra.mxu0 0.0
        %775 = vmatpush.msra.mxu0 %v755
        %776 = vmatpush.msra.mxu0 %v754
        %777 = vmatpush.msra.mxu0 %v753
        %778 = vmatpush.msra.mxu0 %v752
        %779 = vmatmul.f32.gmra.mxu0 %v761
        %v780 = vpop.f32.mrf.mxu0
        %v781 = vadd.f32 %v758, %v780
        %782 = vdwg.mxu0
        %v783 = vadd.f32 %v614, %v781
        %v784 = vsel %vm616, %v783, 0.0
        %785 = vadd.xlane.f32.xlu0 %v784
        %v786 = vpop.xlane.xlu0 %785
        %v787 = vmul.f32 %v786, %v626
        %v788 = vsub.f32 %v783, %v787
        %v789 = vmul.f32 %v788, %v788
        %v790 = vsel %vm616, %v789, 0.0
        %791 = vadd.xlane.f32.xlu0 %v790
        %v792 = vpop.xlane.xlu0 %791
        %v793 = vmul.f32 %v792, %v626
        %v794 = vadd.f32 %v793, 1e-05
        %v795 = vrsqrt.pop %v794
        %v796 = vmul.f32 %v795, %v794
        %v797 = vmul.f32 %v796, %v795
        %v798 = vmul.f32 0.5, %v797
        %v799 = vsub.f32 1.5, %v798
        %v800 = vmul.f32 %v795, %v799
        %vm801 = vweird.f32 %v794
        %vm802 = vweird.f32 %v795
        %vm803 = vmor %vm801, %vm802
        %v804 = vsel %vm803, %v795, %v800
        %v805 = vmul.f32 %v788, %v804
        %v806 = vld [vmem:[%s9] sm:$0x1]
        %v808 = vperm.slane %v806, 0
        %v810 = vmul.f32 %v805, %v808
        %v811 = vld [vmem:[%s10] sm:$0x1]
        %v813 = vperm.slane %v811, 0
        %v815 = vadd.f32 %v810, %v813
        %v816 = vld [vmem:[%s11] sm:$0xff]
        %v817 = vld [vmem:[%s11 + $0x8] sm:$0xff]
        %v818 = vld [vmem:[%s11 + $0x10] sm:$0xff]
        %v819 = vld [vmem:[%s11 + $0x18] sm:$0xff]
        %v820 = vld [vmem:[%s12] sm:$0x1]
        %v822 = vperm.slane %v820, 0
        %v825 = vsel %vm616, %v815, 0
        %827 = vmatpush.msra.mxu0 0.0
        %828 = vmatpush.msra.mxu0 0.0
        %829 = vmatpush.msra.mxu0 0.0
        %830 = vmatpush.msra.mxu0 0.0
        %831 = vmatpush.msra.mxu0 0.0
        %832 = vmatpush.msra.mxu0 0.0
        %833 = vmatpush.msra.mxu0 0.0
        %834 = vmatpush.msra.mxu0 0.0
        %835 = vmatpush.msra.mxu0 0.0
        %836 = vmatpush.msra.mxu0 0.0
        %837 = vmatpush.msra.mxu0 0.0
        %838 = vmatpush.msra.mxu0 0.0
        %839 = vmatpush.msra.mxu0 %v819
        %840 = vmatpush.msra.mxu0 %v818
        %841 = vmatpush.msra.mxu0 %v817
        %842 = vmatpush.msra.mxu0 %v816
        %843 = vmatmul.f32.gmra.mxu0 %v825
        %v844 = vpop.f32.mrf.mxu0
        %v845 = vadd.f32 %v822, %v844
        %846 = vdwg.mxu0
        %v847 = vmax.f32 %v845, 0.0
        %v848 = vld [vmem:[%s13] sm:$0xff]
        %v849 = vld [vmem:[%s13 + $0x8] sm:$0xff]
        %v850 = vld [vmem:[%s13 + $0x10] sm:$0xff]
        %v851 = vld [vmem:[%s13 + $0x18] sm:$0xff]
        %v852 = vld [vmem:[%s13 + $0x20] sm:$0xff]
        %v853 = vld [vmem:[%s13 + $0x28] sm:$0xff]
        %v854 = vld [vmem:[%s13 + $0x30] sm:$0xff]
        %v855 = vld [vmem:[%s13 + $0x38] sm:$0xff]
        %v856 = vld [vmem:[%s14] sm:$0x1]
        %v858 = vperm.slane %v856, 0
        %vm860 = vcmask 523264
        %v862 = vsel %vm860, %v847, 0
        %864 = vmatpush.msra.mxu0 0.0
        %865 = vmatpush.msra.mxu0 0.0
        %866 = vmatpush.msra.mxu0 0.0
        %867 = vmatpush.msra.mxu0 0.0
        %868 = vmatpush.msra.mxu0 0.0
        %869 = vmatpush.msra.mxu0 0.0
        %870 = vmatpush.msra.mxu0 0.0
        %871 = vmatpush.msra.mxu0 0.0
        %872 = vmatpush.msra.mxu0 %v855
        %873 = vmatpush.msra.mxu0 %v854
        %874 = vmatpush.msra.mxu0 %v853
        %875 = vmatpush.msra.mxu0 %v852
        %876 = vmatpush.msra.mxu0 %v851
        %877 = vmatpush.msra.mxu0 %v850
        %878 = vmatpush.msra.mxu0 %v849
        %879 = vmatpush.msra.mxu0 %v848
        %880 = vmatmul.f32.gmra.mxu0 %v862
        %v881 = vpop.f32.mrf.mxu0
        %v882 = vadd.f32 %v858, %v881
        %883 = vdwg.mxu0
        %v884 = vadd.f32 %v783, %v882
        %885 = vst.msk [vmem:[%s574] sm:$0xff] %vm616, %v884
        %v886 = vld [vmem:[%s15] sm:$0xff]
        %v887 = vld [vmem:[%s15 + $0x8] sm:$0xff]
        %v888 = vld [vmem:[%s15 + $0x10] sm:$0xff]
        %v889 = vld [vmem:[%s15 + $0x18] sm:$0xff]
        %v890 = vld [vmem:[#allocation2] sm:$0x1]
        %v892 = vrot.slane %v884, 7
        %v893 = vsel %vm616, %v892, 0
        %895 = vmatpush.msra.mxu0 0.0
        %896 = vmatpush.msra.mxu0 0.0
        %897 = vmatpush.msra.mxu0 0.0
        %898 = vmatpush.msra.mxu0 0.0
        %899 = vmatpush.msra.mxu0 0.0
        %900 = vmatpush.msra.mxu0 0.0
        %901 = vmatpush.msra.mxu0 0.0
        %902 = vmatpush.msra.mxu0 0.0
        %903 = vmatpush.msra.mxu0 0.0
        %904 = vmatpush.msra.mxu0 0.0
        %905 = vmatpush.msra.mxu0 0.0
        %906 = vmatpush.msra.mxu0 0.0
        %907 = vmatpush.msra.mxu0 %v889
        %908 = vmatpush.msra.mxu0 %v888
        %909 = vmatpush.msra.mxu0 %v887
        %910 = vmatpush.msra.mxu0 %v886
        %911 = vmatmul.f32.gmra.mxu0 %v893
        %v912 = vpop.f32.mrf.mxu0
        %v913 = vadd.f32 %v890, %v912
        %914 = vdwg.mxu0
        %v915 = vsub.f32 0.0, %v913
        %v916 = vmul.f32 %v915, 1.442695
        %v917 = vpow.pop %v916
        %v918 = vadd.f32 %v917, 1.0
        %v919 = vrcp.pop %v918
        %v920 = vmul.f32 %v918, %v919
        %v921 = vsub.f32 1.0, %v920
        %v922 = vmul.f32 %v919, %v921
        %v923 = vadd.f32 %v919, %v922
        %vm924 = vweird.f32 %v918
        %vm925 = vweird.f32 %v919
        %vm926 = vmor %vm924, %vm925
        %v927 = vsel %vm926, %v919, %v923
        %v928 = vand.u32 2147483647, %v918
        %vm929 = vcmp.eq.f32.partialorder %v928, 8.507059e+37
        %v930 = vand.u32 %v918, 2147483648
        %v931 = vor.u32 1.1754944e-38, %v930
        %v932 = vsel %vm929, %v931, %v927
        %v933 = vmul.f32 1.0, %v932
        %vm934 = vcmask 0
        %935 = vst.msk [vmem:[%s581] sm:$0x1] %vm934, %v933
        %p936 = scmp.lt.s32.totalorder %s35, 1
        %s937 = scalar_select %p936, %s35, 1
        %s938 = scalar_lea.vmem %s17, %s937
        %s939 = sand.u32 %s431, 1
        %s940 = scalar_lea.sflag [#allocation4], %s939
        %s941 = sand.u32 %s431, 1
        %s942 = smul.addr %s941, 8
        %s943 = scalar_lea.vmem [#allocation3], %s942
        // Predicated region
        $region89: #{tpu_custom_call.1} parent=87 // pred_check
          %p944 = pneg %p415
        $region90: #{tpu_custom_call.1} parent=87 // pred_check_branch
          %946 = sbr.rel (%p944) target = $region92
        $region91: #{tpu_custom_call.1} parent=87 // pred_region
          _
        $region92: #{tpu_custom_call.1} parent=87 // pred_fallthru
          _
        // Predicated region
        $region93: #{tpu_custom_call.1} parent=87 // pred_check
          %p947 = pneg %p441
        $region94: #{tpu_custom_call.1} parent=87 // pred_check_branch
          %949 = sbr.rel (%p947) target = $region96
        $region95: #{tpu_custom_call.1} parent=87 // pred_region
          %951 = vsyncadd %s940, 0
          %s952 = smul.addr %s35, 8
          %s953 = scalar_lea.hbm %s18, %s952
          %s955 = sshll.u32 %s943, 4
          %s956 = int_to_ptr.vmem [resolvable:$true] %s955
          %s957 = sshll.u32 %s953, 4
          %s958 = int_to_ptr.hbm [resolvable:$true] %s957
          %960 = dma.vmem_to_hbm [thread:$0]  %s956, 128, %s958, %s940
        $region96: #{tpu_custom_call.1} parent=87 // pred_fallthru
          _
      $region88: #{tpu_custom_call.1} parent=5 // pred_fallthru
        _
      %p961 = scmp.le.s32.totalorder 2, %s30
      // Predicated region
      $region97: #{tpu_custom_call.1} parent=5 // pred_check
        %p962 = pneg %p961
      $region98: #{tpu_custom_call.1} parent=5 // pred_check_branch
        %964 = sbr.rel (%p962) target = $region100
      $region99: #{tpu_custom_call.1} parent=5 // pred_region
        %s965 = ssub.s32 %s30, 2
        // Predicated region
        $region101: #{tpu_custom_call.1} parent=99 // pred_check
          %p966 = pneg %p421
        $region102: #{tpu_custom_call.1} parent=99 // pred_check_branch
          %968 = sbr.rel (%p966) target = $region104
        $region103: #{tpu_custom_call.1} parent=99 // pred_region
          %p969 = scmp.lt.s32.totalorder %s36, 1
          %s970 = scalar_select %p969, %s36, 1
          %s971 = scalar_lea.vmem %s17, %s970
        $region104: #{tpu_custom_call.1} parent=99 // pred_fallthru
          _
        // Predicated region
        $region105: #{tpu_custom_call.1} parent=99 // pred_check
          %p972 = pneg %p447
        $region106: #{tpu_custom_call.1} parent=99 // pred_check_branch
          %974 = sbr.rel (%p972) target = $region108
        $region107: #{tpu_custom_call.1} parent=99 // pred_region
          %s975 = sand.u32 %s432, 1
          %s976 = scalar_lea.sflag [#allocation4], %s975
          %s977 = sand.u32 %s432, 1
          %s978 = smul.addr %s977, 8
          %s979 = scalar_lea.vmem [#allocation3], %s978
          %981 = dma.done %s976, 128
        $region108: #{tpu_custom_call.1} parent=99 // pred_fallthru
          _
      $region100: #{tpu_custom_call.1} parent=5 // pred_fallthru
        _
    $region6: #{tpu_custom_call.1} parent=1 // loop_footer
      %s34 = sadd.s32 1, %s30
    $region7: #{tpu_custom_call.1} parent=1 // loop_footer_branch
      %29 = sbr.rel target = $region3
    $region8: #{tpu_custom_call.1} parent=1 // loop_exit
      _
    %982 = vsyncpa [#allocation4], 1
    %s983 = scalar_lea.sflag [#allocation4], 1
    %984 = vsyncpa %s983, 1

</llo_original>
